<compile_context>
chip_gen: v6e
topology: v6e:2x2x1
jax: 0.10.0
libtpu: 0.0.40
codegen_flags: <defaults>
</compile_context>

<pallas_src>
import functools

import jax
import jax.numpy as jnp
from jax.experimental import pallas as pl
from jax.experimental.pallas import tpu as pltpu


_DEFAULT_BLOCK_ELEMS = 256 * 1024      # 1 MiB / stream (f32), safe on v5e/v6e/v7x


# ---------------------------------------------------------------------------
# Kernels (pure VPU elementwise on (R, L) blocks; currents block is (2, R, L))
# ---------------------------------------------------------------------------

def _emit_outputs(v, spike_out_ref, v_out_ref, v_th, v_reset, decay):
    fired = v > v_th
    spike_out_ref[...] = fired.astype(jnp.float32)
    v_out_ref[...] = jnp.where(fired, jnp.float32(v_reset), v) * jnp.float32(decay)


def _population_kernel_2spk(v_ref, spk_ex_ref, spk_in_ref, cur_ref,
                            spike_out_ref, v_out_ref, *, v_th, v_reset, decay):
    v = (v_ref[...] + spk_ex_ref[...] + spk_in_ref[...]
         + cur_ref[0] + cur_ref[1])
    _emit_outputs(v, spike_out_ref, v_out_ref, v_th, v_reset, decay)


def _population_kernel_1spk(v_ref, spk_ref, cur_ref,
                            spike_out_ref, v_out_ref, *, v_th, v_reset, decay):
    v = v_ref[...] + spk_ref[...] + cur_ref[0] + cur_ref[1]
    _emit_outputs(v, spike_out_ref, v_out_ref, v_th, v_reset, decay)


def _population_kernel_0spk(v_ref, cur_ref,
                            spike_out_ref, v_out_ref, *, v_th, v_reset, decay):
    v = v_ref[...] + cur_ref[0] + cur_ref[1]
    _emit_outputs(v, spike_out_ref, v_out_ref, v_th, v_reset, decay)


# ---------------------------------------------------------------------------
# Layout / tiling selection
# ---------------------------------------------------------------------------

def _choose_layout(num_p, target_block_elems):
    """Pick a (rows, L) reshape of the (padded) neuron axis and a row-block R.

    num_p is a multiple of 128.  L is a multiple of 128 dividing num_p,
    preferring rows >= 16 (full (8,128) vregs AND grid >= 2 for v7x's 2 TCs),
    then rows >= 8.  R is a multiple of 8 (or the full row extent) sized
    around target_block_elems // L; R need NOT divide rows (partial last
    block is fine for elementwise ops).
    """
    L = None
    for min_rows in (16, 8):
        for cand in (1024, 512, 256, 128):
            if num_p % cand == 0 and num_p // cand >= min_rows:
                L = cand
                break
        if L is not None:
            break
    if L is None:                               # tiny populations
        for cand in (128, 256, 512, 1024):
            if num_p % cand == 0:
                L = cand
                break
    rows = num_p // L

    if rows <= 8:
        R = rows                                # full extent: always legal
    else:
        R = min(rows, max(8, target_block_elems // L))
        if rows >= 16:
            R = min(R, rows // 2)               # keep >= 2 grid blocks (v7x)
        R -= R % 8
        R = max(R, 8)
    grid = pl.cdiv(rows, R)
    return rows, L, R, grid


# ---------------------------------------------------------------------------
# Core implementation (jitted via _get_jitted)
# ---------------------------------------------------------------------------

def _population_update_impl(v_m, currents0, spikes_ex0, spikes_in0, *,
                            v_th, v_reset, decay, target_block_elems,
                            donate_v_m):
    num = v_m.shape[-1]
    pad = (-num) % 128                          # support arbitrary num
    if pad:
        v_m = jnp.pad(v_m, ((0, 0), (0, pad)))
        currents0 = jnp.pad(currents0, ((0, 0), (0, pad)))
        if spikes_ex0 is not None:
            spikes_ex0 = jnp.pad(spikes_ex0, ((0, 0), (0, pad)))
        if spikes_in0 is not None:
            spikes_in0 = jnp.pad(spikes_in0, ((0, 0), (0, pad)))
    num_p = num + pad

    rows, L, R, grid = _choose_layout(num_p, target_block_elems)

    def to2d(x):                                # contiguous -> metadata-only
        return x.reshape(rows, L)

    spikes = [s for s in (spikes_ex0, spikes_in0) if s is not None]
    n_spk = len(spikes)
    kernel_fn = (_population_kernel_0spk, _population_kernel_1spk,
                 _population_kernel_2spk)[n_spk]
    kernel = functools.partial(kernel_fn, v_th=v_th, v_reset=v_reset,
                               decay=decay)

    inputs = (to2d(v_m), *[to2d(s) for s in spikes],
              currents0.reshape(2, rows, L))

    spec2d = pl.BlockSpec((R, L), lambda i: (i, 0))
    spec_cur = pl.BlockSpec((2, R, L), lambda i: (0, i, 0))

    n_streams = 2 + 1 + n_spk + 2               # outputs + v + spikes + currents
    cost = pl.CostEstimate(flops=(4 + n_spk) * num_p,
                           transcendentals=0,
                           bytes_accessed=4 * n_streams * num_p)

    spikes2d, v2d = pl.pallas_call(
        kernel,
        out_shape=(jax.ShapeDtypeStruct((rows, L), jnp.float32),
                   jax.ShapeDtypeStruct((rows, L), jnp.float32)),
        grid_spec=pltpu.PrefetchScalarGridSpec(
            num_scalar_prefetch=0,
            grid=(grid,),
            in_specs=[spec2d] * (1 + n_spk) + [spec_cur],
            out_specs=[spec2d, spec2d],
        ),
        input_output_aliases=({0: 1} if donate_v_m else {}),
        compiler_params=pltpu.CompilerParams(
            dimension_semantics=("parallel",),
            vmem_limit_bytes=32 << 20),
        cost_estimate=cost,
    )(*inputs)

    spikes_out = spikes2d.reshape(1, num_p)
    v_out = v2d.reshape(1, num_p)
    if pad:
        spikes_out = spikes_out[:, :num]
        v_out = v_out[:, :num]
    return spikes_out, v_out


@functools.lru_cache(maxsize=None)
def _get_jitted(v_th, v_reset, decay, target_block_elems, donate_v_m):
    def step(v_m, currents0, spikes_ex0=None, spikes_in0=None):
        return _population_update_impl(
            v_m, currents0, spikes_ex0, spikes_in0,
            v_th=v_th, v_reset=v_reset, decay=decay,
            target_block_elems=target_block_elems, donate_v_m=donate_v_m)
    if donate_v_m:
        return jax.jit(step, donate_argnums=(0,))
    return jax.jit(step)


# ---------------------------------------------------------------------------
# Public wrapper (non-donating)
# ---------------------------------------------------------------------------

def population_update(v_m, currents0, v_th, v_reset, decay,
                      spikes_ex0=None, spikes_in0=None,
                      target_block_elems=_DEFAULT_BLOCK_ELEMS):
    """One Population.update() step.

    Args:
      v_m:        (1, num) f32 membrane potential
      currents0:  (2, num) f32 (currents[0]); channels 0 and 1 are added
      spikes_ex0: optional (1, num) f32 (spikes_ex[0]); None => treated as 0
      spikes_in0: optional (1, num) f32 (spikes_in[0]); None => treated as 0
    Returns:
      (spikes, v_m_new), both (1, num) f32
    """
    fn = _get_jitted(float(v_th), float(v_reset), float(decay),
                     int(target_block_elems), False)
    return fn(v_m, currents0, spikes_ex0, spikes_in0)


# ---------------------------------------------------------------------------
# Stateless-parameter / explicit-state JAX port of Population
# ---------------------------------------------------------------------------

class PopulationJAX:

    def __init__(self, num=1, resolution=0.1, delay=0.1, neuron_param=None,
                 ex_inh_type='excitatory'):
        neuron_param = neuron_param or {}
        self.num = num
        self.h = resolution
        self.delay = delay
        self.min_step = (int(round(self.delay / self.h))
                         if self.delay >= self.h else int(round(1.0 / self.h)))
        self.V_th = float(neuron_param.get('V_th', 15.0))
        self.V_reset = float(neuron_param.get('V_reset', 0.0))
        self.decay = float(neuron_param.get('decay', 0.9))
        v_m0 = float(neuron_param.get('V_m', 0.0) or 0.0)
        # State
        self.V_m = jnp.full((1, num), v_m0, dtype=jnp.float32)
        self._zero_spikes = jnp.zeros((self.min_step, num), dtype=jnp.float32)
        self.spikes_ex = self._zero_spikes
        self.spikes_in = self._zero_spikes
        self._ex_nonzero = False
        self._in_nonzero = False
        # Jitted step: donates V_m and aliases it into the new-V_m output.
        self._step = _get_jitted(self.V_th, self.V_reset, self.decay,
                                 _DEFAULT_BLOCK_ELEMS, True)
        # TODO(synk): on_apu load()/save() state-registry hooks have no JAX
        # equivalent; state is carried explicitly on this object instead.

    def inject_spikes(self, spikes_ex=None, spikes_in=None):
        """External (synapse) writes into the spike buffers before forward()."""
        if spikes_ex is not None:
            self.spikes_ex = spikes_ex
            self._ex_nonzero = True
        if spikes_in is not None:
            self.spikes_in = spikes_in
            self._in_nonzero = True

    def forward(self, currents):
        # currents: (min_step, 2, num) float32
        spk_ex = self.spikes_ex[0:1, :] if self._ex_nonzero else None
        spk_in = self.spikes_in[0:1, :] if self._in_nonzero else None
        spikes, v_new = self._step(self.V_m, currents[0], spk_ex, spk_in)
        # State updates (V_m <- decayed/reset potential; spike buffers cleared)
        self.V_m = v_new
        self.spikes_ex = self._zero_spikes
        self.spikes_in = self._zero_spikes
        self._ex_nonzero = False
        self._in_nonzero = False
        return spikes                        # matches torch forward: (1, num)


# ---------------------------------------------------------------------------
# Reference + self-test
# ---------------------------------------------------------------------------

def _reference(v_m, spikes_ex0, spikes_in0, currents0, v_th, v_reset, decay):
    v = v_m + spikes_ex0 + spikes_in0 + currents0[0:1, :] + currents0[1:2, :]
    cond = (v > v_th).astype(jnp.float32)
    v = (cond * v_reset + (1.0 - cond) * v) * decay
    return cond, v


if __name__ == "__main__":
    key = jax.random.PRNGKey(0)
    neuron_param = {'V_th': 15.0, 'V_reset': 0.0, 'decay': 0.9, 'V_m': 0.0}

    # ------------------------------------------------------------------
    # Test 1: full kernel path (both spike streams), num = 2048
    # ------------------------------------------------------------------
    num = 2048
    k1, k2, k3, k4 = jax.random.split(key, 4)
    v_m = jax.random.uniform(k1, (1, num), dtype=jnp.float32) * 10.0
    spk_ex = jax.random.uniform(k2, (1, num), dtype=jnp.float32) * 5.0
    spk_in = -jax.random.uniform(k3, (1, num), dtype=jnp.float32) * 5.0
    cur = jax.random.normal(k4, (2, num), dtype=jnp.float32) * 10.0

    spikes, v_new = population_update(
        v_m, cur, 15.0, 0.0, 0.9, spikes_ex0=spk_ex, spikes_in0=spk_in)
    spikes = jax.block_until_ready(spikes)
    v_new = jax.block_until_ready(v_new)
    ref_s, ref_v = _reference(v_m, spk_ex, spk_in, cur, 15.0, 0.0, 0.9)
    assert spikes.shape == (1, num) and spikes.dtype == jnp.float32
    assert jnp.array_equal(spikes, ref_s)
    assert jnp.allclose(v_new, ref_v, atol=1e-6)

    # ------------------------------------------------------------------
    # Test 2: PopulationJAX class, fast path (no spike streams), V_m donated
    # ------------------------------------------------------------------
    pop = PopulationJAX(num=num, resolution=0.1, delay=0.1,
                        neuron_param=neuron_param)
    pop.V_m = v_m
    currents = jnp.broadcast_to(cur, (pop.min_step, 2, num))
    zeros = jnp.zeros((1, num), jnp.float32)
    # Reference BEFORE forward (forward donates / invalidates the old V_m).
    ref_s2, ref_v2 = _reference(pop.V_m, zeros, zeros, currents[0],
                                pop.V_th, pop.V_reset, pop.decay)
    ref_s2 = jax.block_until_ready(ref_s2)
    ref_v2 = jax.block_until_ready(ref_v2)
    out = jax.block_until_ready(pop.forward(currents))
    assert jnp.array_equal(out, ref_s2)
    assert jnp.allclose(jax.block_until_ready(pop.V_m), ref_v2, atol=1e-6)

    # ------------------------------------------------------------------
    # Test 3: multi-block grid path (small forced block size), num = 32768
    # ------------------------------------------------------------------
    num3 = 32768
    k5, k6 = jax.random.split(k4)
    v_m3 = jax.random.uniform(k5, (1, num3), dtype=jnp.float32) * 10.0
    cur3 = jax.random.normal(k6, (2, num3), dtype=jnp.float32) * 10.0
    s3, v3 = population_update(v_m3, cur3, 15.0, 0.0, 0.9,
                               target_block_elems=8 * 1024)   # forces grid > 1
    s3 = jax.block_until_ready(s3)
    v3 = jax.block_until_ready(v3)
    z3 = jnp.zeros((1, num3), jnp.float32)
    ref_s3, ref_v3 = _reference(v_m3, z3, z3, cur3, 15.0, 0.0, 0.9)
    assert jnp.array_equal(s3, ref_s3)
    assert jnp.allclose(v3, ref_v3, atol=1e-6)

    # ------------------------------------------------------------------
    # Test 4: one spike stream only + num not a multiple of 128 (padding path)
    # ------------------------------------------------------------------
    num4 = 1000
    k7, k8, k9 = jax.random.split(k6, 3)
    v_m4 = jax.random.uniform(k7, (1, num4), dtype=jnp.float32) * 10.0
    spk4 = jax.random.uniform(k8, (1, num4), dtype=jnp.float32) * 5.0
    cur4 = jax.random.normal(k9, (2, num4), dtype=jnp.float32) * 10.0
    s4, v4 = population_update(v_m4, cur4, 15.0, 0.0, 0.9, spikes_ex0=spk4)
    s4 = jax.block_until_ready(s4)
    v4 = jax.block_until_ready(v4)
    z4 = jnp.zeros((1, num4), jnp.float32)
    ref_s4, ref_v4 = _reference(v_m4, spk4, z4, cur4, 15.0, 0.0, 0.9)
    assert s4.shape == (1, num4)
    assert jnp.array_equal(s4, ref_s4)
    assert jnp.allclose(v4, ref_v4, atol=1e-6)

    print("KERNEL_OK")
</pallas_src>

<mosaic_0001>
module attributes {stable_mosaic.version = 11 : i64} {
  func.func @_population_kernel_2spk(%arg0: i32, %arg1: memref<8x128xf32, #tpu.memory_space<vmem>>, %arg2: memref<8x128xf32, #tpu.memory_space<vmem>>, %arg3: memref<8x128xf32, #tpu.memory_space<vmem>>, %arg4: memref<2x8x128xf32, #tpu.memory_space<vmem>>, %arg5: memref<8x128xf32, #tpu.memory_space<vmem>>, %arg6: memref<8x128xf32, #tpu.memory_space<vmem>>) attributes {dimension_semantics = [#tpu.dimension_semantics<parallel>], iteration_bounds = array<i64: 2>, scalar_prefetch = 0 : i64, scratch_operands = 0 : i64, tpu.core_type = #tpu.core_type<tc>, window_params = [{transform_indices = @transform_0, window_bounds = array<i64: 8, 128>}, {transform_indices = @transform_1, window_bounds = array<i64: 8, 128>}, {transform_indices = @transform_2, window_bounds = array<i64: 8, 128>}, {transform_indices = @transform_3, window_bounds = array<i64: 2, 8, 128>}, {transform_indices = @transform_4, window_bounds = array<i64: 8, 128>}, {transform_indices = @transform_5, window_bounds = array<i64: 8, 128>}]} {
    %c0 = arith.constant 0 : index
    %c0_0 = arith.constant 0 : index
    %0 = vector.load %arg1[%c0, %c0_0] : memref<8x128xf32, #tpu.memory_space<vmem>>, vector<8x128xf32>
    %c0_1 = arith.constant 0 : index
    %c0_2 = arith.constant 0 : index
    %1 = vector.load %arg2[%c0_1, %c0_2] : memref<8x128xf32, #tpu.memory_space<vmem>>, vector<8x128xf32>
    %2 = arith.addf %0, %1 : vector<8x128xf32>
    %c0_3 = arith.constant 0 : index
    %c0_4 = arith.constant 0 : index
    %3 = vector.load %arg3[%c0_3, %c0_4] : memref<8x128xf32, #tpu.memory_space<vmem>>, vector<8x128xf32>
    %4 = arith.addf %2, %3 : vector<8x128xf32>
    %c0_5 = arith.constant 0 : index
    %c0_6 = arith.constant 0 : index
    %c0_7 = arith.constant 0 : index
    %5 = vector.load %arg4[%c0_5, %c0_6, %c0_7] : memref<2x8x128xf32, #tpu.memory_space<vmem>>, vector<1x8x128xf32>
    %6 = vector.shape_cast %5 : vector<1x8x128xf32> to vector<8x128xf32>
    %7 = arith.addf %4, %6 : vector<8x128xf32>
    %c1 = arith.constant 1 : index
    %c0_8 = arith.constant 0 : index
    %c0_9 = arith.constant 0 : index
    %8 = vector.load %arg4[%c1, %c0_8, %c0_9] : memref<2x8x128xf32, #tpu.memory_space<vmem>>, vector<1x8x128xf32>
    %9 = vector.shape_cast %8 : vector<1x8x128xf32> to vector<8x128xf32>
    %10 = arith.addf %7, %9 : vector<8x128xf32>
    %cst = arith.constant 1.500000e+01 : f32
    %11 = vector.broadcast %cst : f32 to vector<8x128xf32>
    %12 = arith.cmpf ogt, %10, %11 : vector<8x128xf32>
    %13 = arith.extui %12 : vector<8x128xi1> to vector<8x128xi32>
    %14 = arith.sitofp %13 : vector<8x128xi32> to vector<8x128xf32>
    %c0_10 = arith.constant 0 : index
    %c0_11 = arith.constant 0 : index
    %15 = vector.load %arg5[%c0_10, %c0_11] : memref<8x128xf32, #tpu.memory_space<vmem>>, vector<8x128xf32>
    tpu.vector_store %arg5[%c0_10, %c0_11], %14 {strides = array<i32>} : memref<8x128xf32, #tpu.memory_space<vmem>>, vector<8x128xf32>,
    %cst_12 = arith.constant 0.000000e+00 : f32
    %16 = vector.broadcast %cst_12 : f32 to vector<8x128xf32>
    %17 = arith.select %12, %16, %10 : vector<8x128xi1>, vector<8x128xf32>
    %cst_13 = arith.constant 0.899999976 : f32
    %18 = vector.broadcast %cst_13 : f32 to vector<8x128xf32>
    %19 = arith.mulf %17, %18 : vector<8x128xf32>
    %c0_14 = arith.constant 0 : index
    %c0_15 = arith.constant 0 : index
    %20 = vector.load %arg6[%c0_14, %c0_15] : memref<8x128xf32, #tpu.memory_space<vmem>>, vector<8x128xf32>
    tpu.vector_store %arg6[%c0_14, %c0_15], %19 {strides = array<i32>} : memref<8x128xf32, #tpu.memory_space<vmem>>, vector<8x128xf32>,
    return
  }
  func.func @transform_0(%arg0: i32) -> (i32, i32) {
    %c0_i32 = arith.constant 0 : i32
    %c0_i32_0 = arith.constant 0 : i32
    return %arg0, %c0_i32 : i32, i32
  }
  func.func @transform_1(%arg0: i32) -> (i32, i32) {
    %c0_i32 = arith.constant 0 : i32
    %c0_i32_0 = arith.constant 0 : i32
    return %arg0, %c0_i32 : i32, i32
  }
  func.func @transform_2(%arg0: i32) -> (i32, i32) {
    %c0_i32 = arith.constant 0 : i32
    %c0_i32_0 = arith.constant 0 : i32
    return %arg0, %c0_i32 : i32, i32
  }
  func.func @transform_3(%arg0: i32) -> (i32, i32, i32) {
    %c0_i32 = arith.constant 0 : i32
    %c0_i32_0 = arith.constant 0 : i32
    %c0_i32_1 = arith.constant 0 : i32
    return %c0_i32, %arg0, %c0_i32_0 : i32, i32, i32
  }
  func.func @transform_4(%arg0: i32) -> (i32, i32) {
    %c0_i32 = arith.constant 0 : i32
    %c0_i32_0 = arith.constant 0 : i32
    return %arg0, %c0_i32 : i32, i32
  }
  func.func @transform_5(%arg0: i32) -> (i32, i32) {
    %c0_i32 = arith.constant 0 : i32
    %c0_i32_0 = arith.constant 0 : i32
    return %arg0, %c0_i32 : i32, i32
  }
}

</mosaic_0001>

<llo_original>
// kernel: step.1
$region0: #{step.1}
  #allocation0 [shape = 'u32[]', space=smem, size = 0x4, offset = 0x4, fixed_abs, tag = 'smem constant byte address 0x4 - core index']
  #allocation1 [shape = 'u32[144,128]{1,0:T(1,128)}', space=vmem, size = 0x12000, scoped, tag = 'internal scratch']
  %s0 = inlined_call_operand.vmem [shape: f32[16,128], index: 0, kind: input, shape index: {}]
  %s1 = inlined_call_operand.vmem [shape: f32[16,128], index: 1, kind: input, shape index: {}]
  %s2 = inlined_call_operand.vmem [shape: f32[16,128], index: 2, kind: input, shape index: {}]
  %s3 = inlined_call_operand.vmem [shape: f32[2,16,128], index: 3, kind: input, shape index: {}]
  %s4 = inlined_call_operand.hbm [shape: f32[16,128], index: 4, kind: output, shape index: {0}]
  %s5 = inlined_call_operand.hbm [shape: f32[16,128], index: 5, kind: output, shape index: {1}]
  %6 = xla_tuple %s4, %s5
  %s7 = sld [smem:[#allocation0]]
  $region95: #{step.1} parent=0
    _
  %s9 = ssub.s32 1, %s7
  %s10 = scalar_select 0, %s9, %s7
  $region1: #{step.1} parent=0
    #allocation2 [shape = 'u8[16384]{0}', space=vmem, size = 0x4000, scoped, tag = 'input window, operand 3']
    #allocation3 [shape = 'u8[8192]{0}', space=vmem, size = 0x2000, scoped, tag = 'output window, operand 0']
    #allocation4 [shape = 's32[2]{0}', space=sflag, size = 0x8, scoped, tag = 'scoped memory for step.1']
    #allocation5 [shape = 'u8[8192]{0}', space=vmem, size = 0x2000, scoped, tag = 'output window, operand 1']
    #allocation6 [shape = 's32[2]{0}', space=sflag, size = 0x8, scoped, tag = 'scoped memory for step.1']
    %11 = vsyncpa [#allocation4], 0
    %s12 = scalar_lea.sflag [#allocation4], 1
    %13 = vsyncpa %s12, 0
    %14 = vsyncpa [#allocation6], 0
    %s15 = scalar_lea.sflag [#allocation6], 1
    %16 = vsyncpa %s15, 0
    loop: start=0, step=1, limit=4
    $region2: #{step.1} parent=1 // loop_pre_header
      _
    $region3: #{step.1} parent=1 // loop_header
      %s18 = sphi 0, %s22
      %p19 = scmp.ge.s32.totalorder %s18, 4
      %s28 = sphi 0, %s30
      %s31 = sphi 0, %s28
      %s32 = sphi 0, %s31
      %s48 = sphi 0, %s32
      %s54 = sphi 0, %s56
      %s57 = sphi 0, %s54
      %s58 = sphi 0, %s57
      %s74 = sphi 0, %s58
      %s80 = sphi 0, %s82
      %s83 = sphi 0, %s80
      %s84 = sphi 0, %s83
      %s100 = sphi 0, %s84
      %s106 = sphi 0, %s108
      %s109 = sphi 0, %s106
      %s110 = sphi 0, %s109
      %s126 = sphi 0, %s110
      %s132 = sphi 0, %s134
      %s135 = sphi 0, %s132
      %s136 = sphi 0, %s135
      %s152 = sphi 0, %s136
      %s158 = sphi 0, %s160
      %s161 = sphi 0, %s158
      %s162 = sphi 0, %s161
      %s178 = sphi 0, %s162
    $region4: #{step.1} parent=1 // loop_header_branch
      %21 = sbr.rel (%p19) target = $region8
    $region5: #{step.1} parent=1 // loop_body
      %s23 = ssub.s32 %s18, 1
      %s24 = ssub.s32 %s18, 2
      %s25 = sadd.s32 %s18, 1
      %s26 = ssub.s32 %s18, %s25
      %p27 = scmp.eq.s32.totalorder %s26, 0
      %s29 = sadd.s32 %s28, 1
      %s30 = scalar_select %p27, %s28, %s29
      %p33 = pneg %p27
      %p34 = scmp.eq.s32.totalorder %s18, 1
      %p35 = por %p33, %p34
      %p36 = scmp.ne.s32.totalorder %s28, %s31
      %p37 = scmp.eq.s32.totalorder %s18, 0
      %p38 = por %p36, %p37
      %p39 = scmp.ne.s32.totalorder %s28, %s31
      %p40 = scmp.eq.s32.totalorder %s23, 1
      %p41 = por %p39, %p40
      %p42 = scmp.ne.s32.totalorder %s31, %s32
      %p43 = scmp.eq.s32.totalorder %s23, 0
      %p44 = por %p42, %p43
      %p45 = scmp.ne.s32.totalorder %s31, %s32
      %p46 = scmp.eq.s32.totalorder %s24, 1
      %p47 = por %p45, %p46
      %p49 = scmp.ne.s32.totalorder %s32, %s48
      %p50 = scmp.eq.s32.totalorder %s24, 0
      %p51 = por %p49, %p50
      %s52 = ssub.s32 %s18, %s25
      %p53 = scmp.eq.s32.totalorder %s52, 0
      %s55 = sadd.s32 %s54, 1
      %s56 = scalar_select %p53, %s54, %s55
      %p59 = pneg %p53
      %p60 = scmp.eq.s32.totalorder %s18, 1
      %p61 = por %p59, %p60
      %p62 = scmp.ne.s32.totalorder %s54, %s57
      %p63 = scmp.eq.s32.totalorder %s18, 0
      %p64 = por %p62, %p63
      %p65 = scmp.ne.s32.totalorder %s54, %s57
      %p66 = scmp.eq.s32.totalorder %s23, 1
      %p67 = por %p65, %p66
      %p68 = scmp.ne.s32.totalorder %s57, %s58
      %p69 = scmp.eq.s32.totalorder %s23, 0
      %p70 = por %p68, %p69
      %p71 = scmp.ne.s32.totalorder %s57, %s58
      %p72 = scmp.eq.s32.totalorder %s24, 1
      %p73 = por %p71, %p72
      %p75 = scmp.ne.s32.totalorder %s58, %s74
      %p76 = scmp.eq.s32.totalorder %s24, 0
      %p77 = por %p75, %p76
      %s78 = ssub.s32 %s18, %s25
      %p79 = scmp.eq.s32.totalorder %s78, 0
      %s81 = sadd.s32 %s80, 1
      %s82 = scalar_select %p79, %s80, %s81
      %p85 = pneg %p79
      %p86 = scmp.eq.s32.totalorder %s18, 1
      %p87 = por %p85, %p86
      %p88 = scmp.ne.s32.totalorder %s80, %s83
      %p89 = scmp.eq.s32.totalorder %s18, 0
      %p90 = por %p88, %p89
      %p91 = scmp.ne.s32.totalorder %s80, %s83
      %p92 = scmp.eq.s32.totalorder %s23, 1
      %p93 = por %p91, %p92
      %p94 = scmp.ne.s32.totalorder %s83, %s84
      %p95 = scmp.eq.s32.totalorder %s23, 0
      %p96 = por %p94, %p95
      %p97 = scmp.ne.s32.totalorder %s83, %s84
      %p98 = scmp.eq.s32.totalorder %s24, 1
      %p99 = por %p97, %p98
      %p101 = scmp.ne.s32.totalorder %s84, %s100
      %p102 = scmp.eq.s32.totalorder %s24, 0
      %p103 = por %p101, %p102
      %s104 = ssub.s32 %s18, %s25
      %p105 = scmp.eq.s32.totalorder %s104, 0
      %s107 = sadd.s32 %s106, 1
      %s108 = scalar_select %p105, %s106, %s107
      %p111 = pneg %p105
      %p112 = scmp.eq.s32.totalorder %s18, 1
      %p113 = por %p111, %p112
      %p114 = scmp.ne.s32.totalorder %s106, %s109
      %p115 = scmp.eq.s32.totalorder %s18, 0
      %p116 = por %p114, %p115
      %p117 = scmp.ne.s32.totalorder %s106, %s109
      %p118 = scmp.eq.s32.totalorder %s23, 1
      %p119 = por %p117, %p118
      %p120 = scmp.ne.s32.totalorder %s109, %s110
      %p121 = scmp.eq.s32.totalorder %s23, 0
      %p122 = por %p120, %p121
      %p123 = scmp.ne.s32.totalorder %s109, %s110
      %p124 = scmp.eq.s32.totalorder %s24, 1
      %p125 = por %p123, %p124
      %p127 = scmp.ne.s32.totalorder %s110, %s126
      %p128 = scmp.eq.s32.totalorder %s24, 0
      %p129 = por %p127, %p128
      %s130 = ssub.s32 %s18, %s25
      %p131 = scmp.eq.s32.totalorder %s130, 0
      %s133 = sadd.s32 %s132, 1
      %s134 = scalar_select %p131, %s132, %s133
      %p137 = pneg %p131
      %p138 = scmp.eq.s32.totalorder %s18, 1
      %p139 = por %p137, %p138
      %p140 = scmp.ne.s32.totalorder %s132, %s135
      %p141 = scmp.eq.s32.totalorder %s18, 0
      %p142 = por %p140, %p141
      %p143 = scmp.ne.s32.totalorder %s132, %s135
      %p144 = scmp.eq.s32.totalorder %s23, 1
      %p145 = por %p143, %p144
      %p146 = scmp.ne.s32.totalorder %s135, %s136
      %p147 = scmp.eq.s32.totalorder %s23, 0
      %p148 = por %p146, %p147
      %p149 = scmp.ne.s32.totalorder %s135, %s136
      %p150 = scmp.eq.s32.totalorder %s24, 1
      %p151 = por %p149, %p150
      %p153 = scmp.ne.s32.totalorder %s136, %s152
      %p154 = scmp.eq.s32.totalorder %s24, 0
      %p155 = por %p153, %p154
      %s156 = ssub.s32 %s18, %s25
      %p157 = scmp.eq.s32.totalorder %s156, 0
      %s159 = sadd.s32 %s158, 1
      %s160 = scalar_select %p157, %s158, %s159
      %p163 = pneg %p157
      %p164 = scmp.eq.s32.totalorder %s18, 1
      %p165 = por %p163, %p164
      %p166 = scmp.ne.s32.totalorder %s158, %s161
      %p167 = scmp.eq.s32.totalorder %s18, 0
      %p168 = por %p166, %p167
      %p169 = scmp.ne.s32.totalorder %s158, %s161
      %p170 = scmp.eq.s32.totalorder %s23, 1
      %p171 = por %p169, %p170
      %p172 = scmp.ne.s32.totalorder %s161, %s162
      %p173 = scmp.eq.s32.totalorder %s23, 0
      %p174 = por %p172, %p173
      %p175 = scmp.ne.s32.totalorder %s161, %s162
      %p176 = scmp.eq.s32.totalorder %s24, 1
      %p177 = por %p175, %p176
      %p179 = scmp.ne.s32.totalorder %s162, %s178
      %p180 = scmp.eq.s32.totalorder %s24, 0
      %p181 = por %p179, %p180
      %p182 = scmp.le.s32.totalorder 1, %s18
      %p183 = scmp.lt.s32.totalorder %s18, 3
      %p184 = pnand %p182, %p183
      %p185 = pneg %p184
      // Predicated region
      $region9: #{step.1} parent=5 // pred_check
        _
      $region10: #{step.1} parent=5 // pred_check_branch
        %187 = sbr.rel (%p184) target = $region12
      $region11: #{step.1} parent=5 // pred_region
        %s188 = ssub.s32 %s18, 1
      $region12: #{step.1} parent=5 // pred_fallthru
        _
      %p189 = scmp.lt.s32.totalorder %s18, 2
      // Predicated region
      $region13: #{step.1} parent=5 // pred_check
        %p190 = pneg %p189
      $region14: #{step.1} parent=5 // pred_check_branch
        %192 = sbr.rel (%p190) target = $region16
      $region15: #{step.1} parent=5 // pred_region
        // Predicated region
        $region17: #{step.1} parent=15 // pred_check
          %p193 = pneg %p38
        $region18: #{step.1} parent=15 // pred_check_branch
          %195 = sbr.rel (%p193) target = $region20
        $region19: #{step.1} parent=15 // pred_region
          %p196 = scmp.lt.s32.totalorder %s18, 1
          %s197 = scalar_select %p196, %s18, 1
          %s198 = smul.addr %s197, 8
          %s199 = scalar_lea.vmem %s0, %s198
        $region20: #{step.1} parent=15 // pred_fallthru
          _
        // Predicated region
        $region21: #{step.1} parent=15 // pred_check
          %p200 = pneg %p64
        $region22: #{step.1} parent=15 // pred_check_branch
          %202 = sbr.rel (%p200) target = $region24
        $region23: #{step.1} parent=15 // pred_region
          %p203 = scmp.lt.s32.totalorder %s18, 1
          %s204 = scalar_select %p203, %s18, 1
          %s205 = smul.addr %s204, 8
          %s206 = scalar_lea.vmem %s1, %s205
        $region24: #{step.1} parent=15 // pred_fallthru
          _
        // Predicated region
        $region25: #{step.1} parent=15 // pred_check
          %p207 = pneg %p90
        $region26: #{step.1} parent=15 // pred_check_branch
          %209 = sbr.rel (%p207) target = $region28
        $region27: #{step.1} parent=15 // pred_region
          %p210 = scmp.lt.s32.totalorder %s18, 1
          %s211 = scalar_select %p210, %s18, 1
          %s212 = smul.addr %s211, 8
          %s213 = scalar_lea.vmem %s2, %s212
        $region28: #{step.1} parent=15 // pred_fallthru
          _
        // Predicated region
        $region29: #{step.1} parent=15 // pred_check
          %p214 = pneg %p116
        $region30: #{step.1} parent=15 // pred_check_branch
          %216 = sbr.rel (%p214) target = $region32
        $region31: #{step.1} parent=15 // pred_region
          %s217 = sand.u32 %s106, 1
          %s218 = sand.u32 %s106, 1
          %s219 = smul.addr %s218, 16
          %s220 = scalar_lea.vmem [#allocation2], %s219
          %s221 = smul.addr %s18, 8
          %s222 = scalar_lea.vmem %s3, %s221
          // Predicated region
          $region33: #{step.1} parent=31 // pred_check
            _
          $region34: #{step.1} parent=31 // pred_check_branch
            %224 = sbr.rel (0) target = $region36
          $region35: #{step.1} parent=31 // pred_region
            // Predicated region
            $region37: #{step.1} parent=35 // pred_check
              _
            $region38: #{step.1} parent=35 // pred_check_branch
              %226 = sbr.rel (0) target = $region40
            $region39: #{step.1} parent=35 // pred_region
              // Predicated region
              $region52: #{step.1} parent=39 // pred_check
                _
              $region53: #{step.1} parent=39 // pred_check_branch
                %244 = sbr.rel (0) target = $region55
              $region54: #{step.1} parent=39 // pred_region
                loop: start=0, step=1, limit=1
                $region56: #{step.1} parent=54 // loop_pre_header
                  _
                $region57: #{step.1} parent=54 // loop_header
                  %s246 = sphi 0, %s250
                  %p247 = scmp.ge.s32.totalorder %s246, 1
                  %s251 = sphi %s222, %s222
                  %s252 = sphi %s220, %s220
                $region58: #{step.1} parent=54 // loop_header_branch
                  %249 = sbr.rel (%p247) target = $region62
                $region59: #{step.1} parent=54 // loop_body
                  %v253 = vld [vmem:[%s251] sm:$0xff]
                  %254 = vst [vmem:[%s252] sm:$0xff] %v253
                  %v255 = vld [vmem:[%s251 + $0x10] sm:$0xff]
                  %256 = vst [vmem:[%s252 + $0x8] sm:$0xff] %v255
                $region60: #{step.1} parent=54 // loop_footer
                  %s250 = sadd.s32 1, %s246
                $region61: #{step.1} parent=54 // loop_footer_branch
                  %245 = sbr.rel target = $region57
                $region62: #{step.1} parent=54 // loop_exit
                  _
              $region55: #{step.1} parent=39 // pred_fallthru
                _
              // Predicated region
              $region63: #{step.1} parent=39 // pred_check
                _
              $region64: #{step.1} parent=39 // pred_check_branch
                %258 = sbr.rel target = $region66
              $region65: #{step.1} parent=39 // pred_region
                _
              $region66: #{step.1} parent=39 // pred_fallthru
                _
            $region40: #{step.1} parent=35 // pred_fallthru
              _
            // Predicated region
            $region41: #{step.1} parent=35 // pred_check
              _
            $region42: #{step.1} parent=35 // pred_check_branch
              %228 = sbr.rel target = $region44
            $region43: #{step.1} parent=35 // pred_region
              %s230 = ssub.s32 256, 1
              loop: start=0, step=1, limit=1
              $region45: #{step.1} parent=43 // loop_pre_header
                _
              $region46: #{step.1} parent=43 // loop_header
                %s232 = sphi 0, %s236
                %p233 = scmp.ge.s32.totalorder %s232, 1
                %s237 = sphi %s222, %s222
                %s238 = sphi %s220, %s220
              $region47: #{step.1} parent=43 // loop_header_branch
                %235 = sbr.rel (%p233) target = $region51
              $region48: #{step.1} parent=43 // loop_body
                %v239 = vld [vmem:[%s237] sm:%s230]
                %240 = vst [vmem:[%s238] sm:%s230] %v239
                %v241 = vld [vmem:[%s237 + $0x10] sm:%s230]
                %242 = vst [vmem:[%s238 + $0x8] sm:%s230] %v241
              $region49: #{step.1} parent=43 // loop_footer
                %s236 = sadd.s32 1, %s232
              $region50: #{step.1} parent=43 // loop_footer_branch
                %231 = sbr.rel target = $region46
              $region51: #{step.1} parent=43 // loop_exit
                _
            $region44: #{step.1} parent=35 // pred_fallthru
              _
          $region36: #{step.1} parent=31 // pred_fallthru
            _
          %259 = vnop
        $region32: #{step.1} parent=15 // pred_fallthru
          _
      $region16: #{step.1} parent=5 // pred_fallthru
        _
      %p260 = scmp.le.s32.totalorder 1, %s18
      %p261 = scmp.lt.s32.totalorder %s18, 3
      %p262 = pnand %p260, %p261
      %p263 = pneg %p262
      // Predicated region
      $region67: #{step.1} parent=5 // pred_check
        _
      $region68: #{step.1} parent=5 // pred_check_branch
        %265 = sbr.rel (%p262) target = $region70
      $region69: #{step.1} parent=5 // pred_region
        %s266 = ssub.s32 %s18, 1
        %s267 = sand.u32 %s109, 1
        %s268 = sand.u32 %s109, 1
        %s269 = smul.addr %s268, 16
        %s270 = scalar_lea.vmem [#allocation2], %s269
        // Predicated region
        $region71: #{step.1} parent=69 // pred_check
          %p271 = pneg %p122
        $region72: #{step.1} parent=69 // pred_check_branch
          %273 = sbr.rel (%p271) target = $region74
        $region73: #{step.1} parent=69 // pred_region
          _
        $region74: #{step.1} parent=69 // pred_fallthru
          _
        %p274 = scmp.lt.s32.totalorder %s23, 1
        %s275 = scalar_select %p274, %s23, 1
        %s276 = smul.addr %s275, 8
        %s277 = scalar_lea.vmem %s0, %s276
        %p278 = pneg %p44
        %p279 = pneg %p41
        %p280 = scmp.lt.s32.totalorder %s23, 1
        %s281 = scalar_select %p280, %s23, 1
        %s282 = smul.addr %s281, 8
        %s283 = scalar_lea.vmem %s1, %s282
        %p284 = pneg %p70
        %p285 = pneg %p67
        %p286 = scmp.lt.s32.totalorder %s23, 1
        %s287 = scalar_select %p286, %s23, 1
        %s288 = smul.addr %s287, 8
        %s289 = scalar_lea.vmem %s2, %s288
        %p290 = pneg %p96
        %p291 = pneg %p93
        %s292 = sand.u32 %s109, 1
        %s293 = sand.u32 %s109, 1
        %s294 = smul.addr %s293, 16
        %s295 = scalar_lea.vmem [#allocation2], %s294
        %p296 = pneg %p122
        %p297 = pneg %p119
        %p298 = pneg %p148
        %p299 = pneg %p145
        %s300 = sand.u32 %s135, 1
        %s301 = scalar_lea.sflag [#allocation4], %s300
        %s302 = sand.u32 %s135, 1
        %s303 = smul.addr %s302, 8
        %s304 = scalar_lea.vmem [#allocation3], %s303
        %p305 = pneg %p174
        %p306 = pneg %p171
        %s307 = sand.u32 %s161, 1
        %s308 = scalar_lea.sflag [#allocation6], %s307
        %s309 = sand.u32 %s161, 1
        %s310 = smul.addr %s309, 8
        %s311 = scalar_lea.vmem [#allocation5], %s310
        %p312 = scmp.lt.s32.totalorder %s23, 1
        %s313 = scalar_select %p312, %s23, 1
        %s314 = smul.addr %s313, 8
        %s315 = scalar_lea.vmem %s0, %s314
        %p316 = scmp.lt.s32.totalorder %s23, 1
        %s317 = scalar_select %p316, %s23, 1
        %s318 = smul.addr %s317, 8
        %s319 = scalar_lea.vmem %s1, %s318
        %p320 = scmp.lt.s32.totalorder %s23, 1
        %s321 = scalar_select %p320, %s23, 1
        %s322 = smul.addr %s321, 8
        %s323 = scalar_lea.vmem %s2, %s322
        %v324 = vld [vmem:[%s315] sm:$0xff]
        %v325 = vld [vmem:[%s319] sm:$0xff]
        %v326 = vadd.f32 %v324, %v325
        %v327 = vld [vmem:[%s323] sm:$0xff]
        %v328 = vadd.f32 %v326, %v327
        %v329 = vld [vmem:[%s270] sm:$0xff]
        %v330 = vadd.f32 %v328, %v329
        %s331 = scalar_lea.vmem %s270, 8 [#allocation2]
        %v332 = vld [vmem:[%s331] sm:$0xff]
        %v333 = vadd.f32 %v330, %v332
        %vm334 = vcmp.gt.f32.partialorder %v333, 15.0
        %v335 = vsel %vm334, 1, 0
        %v336 = vcvt.s32.f32 %v335
        %337 = vst [vmem:[%s304] sm:$0xff] %v336
        %v338 = vsel %vm334, 0.0, %v333
        %v339 = vmul.f32 %v338, 0.9
        %340 = vst [vmem:[%s311] sm:$0xff] %v339
        %s341 = sand.u32 %s135, 1
        %s342 = scalar_lea.sflag [#allocation4], %s341
        %s343 = sand.u32 %s135, 1
        %s344 = smul.addr %s343, 8
        %s345 = scalar_lea.vmem [#allocation3], %s344
        %s346 = sand.u32 %s161, 1
        %s347 = scalar_lea.sflag [#allocation6], %s346
        %s348 = sand.u32 %s161, 1
        %s349 = smul.addr %s348, 8
        %s350 = scalar_lea.vmem [#allocation5], %s349
        // Predicated region
        $region75: #{step.1} parent=69 // pred_check
          %p351 = pneg %p145
        $region76: #{step.1} parent=69 // pred_check_branch
          %353 = sbr.rel (%p351) target = $region78
        $region77: #{step.1} parent=69 // pred_region
          %s355 = ssub.s32 128, 128
          %356 = vsyncadd %s342, %s355
          %s357 = smul.addr %s23, 128
          %s358 = scalar_lea.hbm %s4, %s357
          %s360 = sshll.u32 %s345, 4
          %s361 = int_to_ptr.vmem [resolvable:$true] %s360
          %363 = dma.vmem_to_hbm [thread:$0]  %s361, 128, %s358, %s342
        $region78: #{step.1} parent=69 // pred_fallthru
          _
        // Predicated region
        $region79: #{step.1} parent=69 // pred_check
          %p364 = pneg %p171
        $region80: #{step.1} parent=69 // pred_check_branch
          %366 = sbr.rel (%p364) target = $region82
        $region81: #{step.1} parent=69 // pred_region
          %s368 = ssub.s32 128, 128
          %369 = vsyncadd %s347, %s368
          %s370 = smul.addr %s23, 128
          %s371 = scalar_lea.hbm %s5, %s370
          %s373 = sshll.u32 %s350, 4
          %s374 = int_to_ptr.vmem [resolvable:$true] %s373
          %376 = dma.vmem_to_hbm [thread:$0]  %s374, 128, %s371, %s347
        $region82: #{step.1} parent=69 // pred_fallthru
          _
      $region70: #{step.1} parent=5 // pred_fallthru
        _
      %p377 = scmp.le.s32.totalorder 2, %s18
      // Predicated region
      $region83: #{step.1} parent=5 // pred_check
        %p378 = pneg %p377
      $region84: #{step.1} parent=5 // pred_check_branch
        %380 = sbr.rel (%p378) target = $region86
      $region85: #{step.1} parent=5 // pred_region
        %s381 = ssub.s32 %s18, 2
        // Predicated region
        $region87: #{step.1} parent=85 // pred_check
          %p382 = pneg %p151
        $region88: #{step.1} parent=85 // pred_check_branch
          %384 = sbr.rel (%p382) target = $region90
        $region89: #{step.1} parent=85 // pred_region
          %s385 = sand.u32 %s136, 1
          %s386 = scalar_lea.sflag [#allocation4], %s385
          %s387 = sand.u32 %s136, 1
          %s388 = smul.addr %s387, 8
          %s389 = scalar_lea.vmem [#allocation3], %s388
          %390 = dma.done %s386, 128
        $region90: #{step.1} parent=85 // pred_fallthru
          _
        // Predicated region
        $region91: #{step.1} parent=85 // pred_check
          %p391 = pneg %p177
        $region92: #{step.1} parent=85 // pred_check_branch
          %393 = sbr.rel (%p391) target = $region94
        $region93: #{step.1} parent=85 // pred_region
          %s394 = sand.u32 %s162, 1
          %s395 = scalar_lea.sflag [#allocation6], %s394
          %s396 = sand.u32 %s162, 1
          %s397 = smul.addr %s396, 8
          %s398 = scalar_lea.vmem [#allocation5], %s397
          %399 = dma.done %s395, 128
        $region94: #{step.1} parent=85 // pred_fallthru
          _
      $region86: #{step.1} parent=5 // pred_fallthru
        _
    $region6: #{step.1} parent=1 // loop_footer
      %s22 = sadd.s32 1, %s18
    $region7: #{step.1} parent=1 // loop_footer_branch
      %17 = sbr.rel target = $region3
    $region8: #{step.1} parent=1 // loop_exit
      _
    %400 = vsyncpa [#allocation4], 1
    %s401 = scalar_lea.sflag [#allocation4], 1
    %402 = vsyncpa %s401, 1
    %403 = vsyncpa [#allocation6], 1
    %s404 = scalar_lea.sflag [#allocation6], 1
    %405 = vsyncpa %s404, 1

</llo_original>
